<compile_context>
chip_gen: v5e
topology: v5e:2x2
jax: 0.10.0
libtpu: 0.0.40
codegen_flags: <defaults>
</compile_context>

<pallas_src>
import functools

import jax
import jax.numpy as jnp
from jax.experimental import pallas as pl
from jax.experimental.pallas import tpu as pltpu


def _round_up(x, m):
    return ((x + m - 1) // m) * m


@functools.lru_cache(maxsize=1)
def _vmem_capacity_bytes():
    """Physical VMEM per TensorCore (128 MiB v5e/v6e, 64 MiB v7x). Falls back
    to the most conservative (v7x) value if the query is unavailable."""
    try:
        return int(pltpu.get_tpu_info().vmem_capacity_bytes)
    except Exception:
        return 64 * 2**20


# ---------------------------------------------------------------------------
# Kernel: one batch tile, 4x (MXU matmul + bias + ReLU), everything in VMEM.
# ---------------------------------------------------------------------------
def _autoencoder2_kernel(
    x_ref,
    w1_ref, b1_ref,
    w2_ref, b2_ref,
    w3_ref, b3_ref,
    w4_ref, b4_ref,
    o_ref,
):
    cd = w1_ref.dtype  # MXU-input dtype (f32 or bf16); accumulation is f32.

    def layer(h, w_ref, b_ref, out_dtype):
        y = jnp.dot(h, w_ref[...], preferred_element_type=jnp.float32) + b_ref[...]
        return jnp.maximum(y, 0.0).astype(out_dtype)

    h = x_ref[...].astype(cd)
    h = layer(h, w1_ref, b1_ref, cd)                       # N    -> N/2, ReLU
    h = layer(h, w2_ref, b2_ref, cd)                       # N/2  -> N/4, ReLU
    h = layer(h, w3_ref, b3_ref, cd)                       # N/4  -> N/2, ReLU
    # Final layer: write o_ref.dtype directly from the f32 accumulate+ReLU
    # (no extra cast pass over the largest tensor, no double rounding).
    o_ref[...] = layer(h, w4_ref, b4_ref, o_ref.dtype)     # N/2  -> N,   ReLU


# ---------------------------------------------------------------------------
# One-time parameter preparation (outside the per-call jit path).
# ---------------------------------------------------------------------------
def _layer_dims(num_attributes):
    n = num_attributes
    return [
        ("enc1", n, n // 2),
        ("enc2", n // 2, n // 4),
        ("dec1", n // 4, n // 2),
        ("dec2", n // 2, n),
    ]


def prepare_params(params, num_attributes, compute_dtype=None):
    """Transpose PyTorch (out, in) weights to (in, out), zero-pad every feature
    dim up to a multiple of 128 (lane-dense MXU operands; zero padding is
    numerically exact), and cast weights to `compute_dtype`. Biases stay f32
    (added post-accumulate).

    compute_dtype=None -> auto: bf16 once f32-resident weights would crowd the
    current generation's VMEM (hits much earlier on v7x's 64 MiB than on
    v5e/v6e's 128 MiB), else f32."""
    dims = _layer_dims(num_attributes)
    if compute_dtype is None:
        f32_w_bytes = 4 * sum(
            _round_up(i, 128) * _round_up(o, 128) for _, i, o in dims
        )
        compute_dtype = (
            jnp.bfloat16 if f32_w_bytes > 0.45 * _vmem_capacity_bytes()
            else jnp.float32
        )
    # TODO(synk): for very large N where even bf16 weights exceed ~85% of VMEM,
    # tile enc1/dec2 over the feature dim (extra grid axis / pltpu.emit_pipeline)
    # instead of keeping all four weights fully VMEM-resident.
    prepped = []
    for name, fan_in, fan_out in dims:
        w, b = params[name]
        in_p, out_p = _round_up(fan_in, 128), _round_up(fan_out, 128)
        wp = jnp.zeros((in_p, out_p), jnp.float32)
        wp = wp.at[:fan_in, :fan_out].set(jnp.asarray(w, jnp.float32).T)
        bp = jnp.zeros((1, out_p), jnp.float32)
        bp = bp.at[0, :fan_out].set(jnp.asarray(b, jnp.float32))
        prepped.extend([wp.astype(compute_dtype), bp])
    return tuple(prepped)


# ---------------------------------------------------------------------------
# VMEM-budget-aware tile selection.
# ---------------------------------------------------------------------------
def _vmem_estimate(tb, Np, weight_bytes, io_itemsize, cd_itemsize):
    io_tiles = 2 * tb * Np * io_itemsize * 2              # x + out, double-buffered
    acc = tb * Np * 4                                      # widest f32 accumulator
    hidden = tb * (Np // 2 + Np // 4 + Np // 2) * cd_itemsize
    return weight_bytes + io_tiles + acc + hidden


def _choose_batch_tile(B, Np, weight_bytes, io_itemsize, cd_itemsize, vmem_budget):
    sublane = max(8, 32 // cd_itemsize)                    # 8 f32 / 16 bf16 packing
    cap = 1024                                             # amortize ~0.35us/step
    # Keep >=2 grid tiles when the batch allows it so ("parallel",) actually
    # shards across both v7x TensorCores (harmless on single-TC v5e/v6e).
    cap = min(cap, _round_up(max(pl.cdiv(B, 2), 1), sublane))
    cap = min(cap, _round_up(B, sublane))
    tb = max(cap, sublane)
    while tb > sublane and _vmem_estimate(
        tb, Np, weight_bytes, io_itemsize, cd_itemsize
    ) > vmem_budget:
        tb -= sublane
    return tb


# ---------------------------------------------------------------------------
# Forward wrappers.
# ---------------------------------------------------------------------------
def _xla_forward(x, prepped):
    """XLA-fused path for tiny problems (the padded layers would be mostly
    wasted MXU work and the pallas_call is dominated by fixed overhead)."""
    w1, b1, w2, b2, w3, b3, w4, b4 = prepped
    N = x.shape[1]
    Np = w1.shape[0]
    h = x if Np == N else jnp.pad(x, ((0, 0), (0, Np - N)))
    for w, b in ((w1, b1), (w2, b2), (w3, b3)):
        h = jnp.maximum(
            jnp.dot(h.astype(w.dtype), w, preferred_element_type=jnp.float32) + b, 0.0
        )
    out = jnp.maximum(
        jnp.dot(h.astype(w4.dtype), w4, preferred_element_type=jnp.float32) + b4, 0.0
    ).astype(x.dtype)
    return out if Np == N else out[:, :N]


@functools.partial(jax.jit, static_argnames=("batch_tile", "use_pallas"))
def autoencoder2_forward(x, prepped, batch_tile=None, use_pallas=None):
    """x: (B, N). prepped: output of prepare_params() (pre-transposed,
    lane-padded weights). Output dtype == x dtype, so HBM-bound callers can
    stream bf16 activations in/out; accumulation stays f32 in-kernel."""
    w1, b1, w2, b2, w3, b3, w4, b4 = prepped
    B, N = x.shape
    Np = w1.shape[0]                                       # padded N (mult of 128)

    if use_pallas is None:
        use_pallas = Np > 128                              # tiny problems -> XLA
    if not use_pallas:
        return _xla_forward(x, prepped)

    weights = (w1, w2, w3, w4)
    biases = (b1, b2, b3, b4)
    weight_bytes = sum(int(a.size) * a.dtype.itemsize for a in weights + biases)
    io_itemsize = x.dtype.itemsize
    cd_itemsize = jnp.dtype(w1.dtype).itemsize

    vmem_cap = _vmem_capacity_bytes()
    vmem_limit = int(0.85 * vmem_cap)

    tb = (
        batch_tile
        if batch_tile is not None
        else _choose_batch_tile(B, Np, weight_bytes, io_itemsize, cd_itemsize, vmem_limit)
    )
    est = _vmem_estimate(tb, Np, weight_bytes, io_itemsize, cd_itemsize)
    if est > vmem_limit:                                   # never under-provision
        vmem_limit = int(min(0.95 * vmem_cap, est))

    # Feature pad ONLY when N is not lane-aligned; explicit zeros are required
    # (undefined lanes * zero weight rows could yield NaN). The batch dim is
    # NOT padded: grid = cdiv(B, tb) and Pallas masks the partial last block's
    # writeback, so there is no extra HBM pad/slice pass over x/out.
    x_in = x if Np == N else jnp.pad(x, ((0, 0), (0, Np - N)))

    grid = (pl.cdiv(B, tb),)

    def resident(arr):
        # Whole array, constant block index -> VMEM-resident across the grid.
        # Single-buffered: 2-deep buffering of a never-changing block is waste.
        if hasattr(pl, "Buffered"):
            try:
                return pl.BlockSpec(
                    arr.shape, lambda i: (0, 0), pipeline_mode=pl.Buffered(1)
                )
            except TypeError:
                pass
        return pl.BlockSpec(arr.shape, lambda i: (0, 0))

    flops = 2 * B * sum(w.shape[0] * w.shape[1] for w in weights)
    cost = pl.CostEstimate(
        flops=flops,
        transcendentals=0,
        bytes_accessed=weight_bytes + 2 * B * Np * io_itemsize,
    )

    out = pl.pallas_call(
        _autoencoder2_kernel,
        out_shape=jax.ShapeDtypeStruct((B, Np), x.dtype),
        grid=grid,
        in_specs=[
            pl.BlockSpec((tb, Np), lambda i: (i, 0)),
            resident(w1), resident(b1),
            resident(w2), resident(b2),
            resident(w3), resident(b3),
            resident(w4), resident(b4),
        ],
        out_specs=pl.BlockSpec((tb, Np), lambda i: (i, 0)),
        compiler_params=pltpu.CompilerParams(
            dimension_semantics=("parallel",),             # megacore-shard batch tiles
            vmem_limit_bytes=vmem_limit,
        ),
        cost_estimate=cost,
    )(x_in, w1, b1, w2, b2, w3, b3, w4, b4)

    return out if Np == N else out[:, :N]


# ---------------------------------------------------------------------------
# Init + reference (mirror the PyTorch module).
# ---------------------------------------------------------------------------
def init_params(key, num_attributes):
    """PyTorch-style init: U(-1/sqrt(fan_in), 1/sqrt(fan_in)), weight (out, in)."""
    params = {}
    for name, fan_in, fan_out in _layer_dims(num_attributes):
        key, kw, kb = jax.random.split(key, 3)
        bound = 1.0 / jnp.sqrt(jnp.float32(fan_in))
        w = jax.random.uniform(kw, (fan_out, fan_in), jnp.float32, -bound, bound)
        b = jax.random.uniform(kb, (fan_out,), jnp.float32, -bound, bound)
        params[name] = (w, b)
    return params


def reference_forward(x, params):
    h = x
    for name in ("enc1", "enc2", "dec1", "dec2"):
        w, b = params[name]
        h = jnp.maximum(h @ w.T + b, 0.0)
    return h


if __name__ == "__main__":
    key = jax.random.PRNGKey(0)

    # --- Test A: module-consistent tiny shapes, Pallas path forced -----------
    n_a, b_a = 32, 8
    key, kx_a, kp_a = jax.random.split(key, 3)
    x_a = jax.random.normal(kx_a, (b_a, n_a), jnp.float32)
    params_a = init_params(kp_a, n_a)
    prep_a = jax.block_until_ready(prepare_params(params_a, n_a, jnp.float32))

    out_a = jax.block_until_ready(autoencoder2_forward(x_a, prep_a, use_pallas=True))
    ref_a = reference_forward(x_a, params_a)
    assert out_a.shape == (b_a, n_a)
    assert jnp.allclose(out_a, ref_a, atol=1e-5, rtol=1e-5), "pallas f32 mismatch"

    # Tiny-shape auto dispatch (XLA path) must agree too.
    out_a2 = jax.block_until_ready(autoencoder2_forward(x_a, prep_a))
    assert jnp.allclose(out_a2, ref_a, atol=1e-5, rtol=1e-5), "xla path mismatch"

    # --- Test B: lane-aligned N (no pads/slices), partial last batch tile ----
    n_b, b_b = 256, 300
    key, kx_b, kp_b = jax.random.split(key, 3)
    x_b = jax.random.normal(kx_b, (b_b, n_b), jnp.float32)
    params_b = init_params(kp_b, n_b)
    prep_b = jax.block_until_ready(prepare_params(params_b, n_b, jnp.float32))
    out_b = jax.block_until_ready(autoencoder2_forward(x_b, prep_b))
    ref_b = reference_forward(x_b, params_b)
    assert out_b.shape == (b_b, n_b)
    assert jnp.allclose(out_b, ref_b, atol=1e-4, rtol=1e-4), "partial-tile mismatch"

    # --- Test C: bf16 MXU inputs, f32 accumulation (looser tolerance) --------
    prep_c = jax.block_until_ready(prepare_params(params_b, n_b, jnp.bfloat16))
    out_c = jax.block_until_ready(autoencoder2_forward(x_b, prep_c))
    assert jnp.allclose(out_c, ref_b, atol=5e-2, rtol=5e-2), "bf16 path mismatch"

    print("KERNEL_OK")
</pallas_src>

<mosaic_0001>
module attributes {stable_mosaic.version = 11 : i64} {
  func.func @_autoencoder2_kernel(%arg0: i32, %arg1: memref<8x128xf32, #tpu.memory_space<vmem>>, %arg2: memref<128x128xf32, #tpu.memory_space<vmem>>, %arg3: memref<1x128xf32, #tpu.memory_space<vmem>>, %arg4: memref<128x128xf32, #tpu.memory_space<vmem>>, %arg5: memref<1x128xf32, #tpu.memory_space<vmem>>, %arg6: memref<128x128xf32, #tpu.memory_space<vmem>>, %arg7: memref<1x128xf32, #tpu.memory_space<vmem>>, %arg8: memref<128x128xf32, #tpu.memory_space<vmem>>, %arg9: memref<1x128xf32, #tpu.memory_space<vmem>>, %arg10: memref<8x128xf32, #tpu.memory_space<vmem>>) attributes {dimension_semantics = [#tpu.dimension_semantics<parallel>], iteration_bounds = array<i64: 1>, scalar_prefetch = 0 : i64, scratch_operands = 0 : i64, tpu.core_type = #tpu.core_type<tc>, window_params = [{transform_indices = @transform_0, window_bounds = array<i64: 8, 128>}, {pipeline_mode = #tpu.pipeline_mode<synchronous>, transform_indices = @transform_1, window_bounds = array<i64: 128, 128>}, {pipeline_mode = #tpu.pipeline_mode<synchronous>, transform_indices = @transform_2, window_bounds = array<i64: 1, 128>}, {pipeline_mode = #tpu.pipeline_mode<synchronous>, transform_indices = @transform_3, window_bounds = array<i64: 128, 128>}, {pipeline_mode = #tpu.pipeline_mode<synchronous>, transform_indices = @transform_4, window_bounds = array<i64: 1, 128>}, {pipeline_mode = #tpu.pipeline_mode<synchronous>, transform_indices = @transform_5, window_bounds = array<i64: 128, 128>}, {pipeline_mode = #tpu.pipeline_mode<synchronous>, transform_indices = @transform_6, window_bounds = array<i64: 1, 128>}, {pipeline_mode = #tpu.pipeline_mode<synchronous>, transform_indices = @transform_7, window_bounds = array<i64: 128, 128>}, {pipeline_mode = #tpu.pipeline_mode<synchronous>, transform_indices = @transform_8, window_bounds = array<i64: 1, 128>}, {transform_indices = @transform_9, window_bounds = array<i64: 8, 128>}]} {
    %c0 = arith.constant 0 : index
    %c0_0 = arith.constant 0 : index
    %0 = vector.load %arg1[%c0, %c0_0] : memref<8x128xf32, #tpu.memory_space<vmem>>, vector<8x128xf32>
    %c0_1 = arith.constant 0 : index
    %c0_2 = arith.constant 0 : index
    %1 = vector.load %arg2[%c0_1, %c0_2] : memref<128x128xf32, #tpu.memory_space<vmem>>, vector<128x128xf32>
    %cst = arith.constant dense<0.000000e+00> : vector<8x128xf32>
    %2 = tpu.matmul %0, %1, %cst {dimension_numbers = #tpu.dot_dimension_numbers<[1], [0], [0], [1], [0, 0, 1, 1], [], []>} : vector<8x128xf32>, vector<128x128xf32>, vector<8x128xf32> -> vector<8x128xf32>
    %c0_3 = arith.constant 0 : index
    %c0_4 = arith.constant 0 : index
    %3 = vector.load %arg3[%c0_3, %c0_4] : memref<1x128xf32, #tpu.memory_space<vmem>>, vector<1x128xf32>
    %4 = vector.broadcast %3 : vector<1x128xf32> to vector<8x128xf32>
    %5 = arith.addf %2, %4 : vector<8x128xf32>
    %cst_5 = arith.constant 0.000000e+00 : f32
    %6 = vector.broadcast %cst_5 : f32 to vector<8x128xf32>
    %7 = arith.maximumf %5, %6 : vector<8x128xf32>
    %c0_6 = arith.constant 0 : index
    %c0_7 = arith.constant 0 : index
    %8 = vector.load %arg4[%c0_6, %c0_7] : memref<128x128xf32, #tpu.memory_space<vmem>>, vector<128x128xf32>
    %cst_8 = arith.constant dense<0.000000e+00> : vector<8x128xf32>
    %9 = tpu.matmul %7, %8, %cst_8 {dimension_numbers = #tpu.dot_dimension_numbers<[1], [0], [0], [1], [0, 0, 1, 1], [], []>} : vector<8x128xf32>, vector<128x128xf32>, vector<8x128xf32> -> vector<8x128xf32>
    %c0_9 = arith.constant 0 : index
    %c0_10 = arith.constant 0 : index
    %10 = vector.load %arg5[%c0_9, %c0_10] : memref<1x128xf32, #tpu.memory_space<vmem>>, vector<1x128xf32>
    %11 = vector.broadcast %10 : vector<1x128xf32> to vector<8x128xf32>
    %12 = arith.addf %9, %11 : vector<8x128xf32>
    %cst_11 = arith.constant 0.000000e+00 : f32
    %13 = vector.broadcast %cst_11 : f32 to vector<8x128xf32>
    %14 = arith.maximumf %12, %13 : vector<8x128xf32>
    %c0_12 = arith.constant 0 : index
    %c0_13 = arith.constant 0 : index
    %15 = vector.load %arg6[%c0_12, %c0_13] : memref<128x128xf32, #tpu.memory_space<vmem>>, vector<128x128xf32>
    %cst_14 = arith.constant dense<0.000000e+00> : vector<8x128xf32>
    %16 = tpu.matmul %14, %15, %cst_14 {dimension_numbers = #tpu.dot_dimension_numbers<[1], [0], [0], [1], [0, 0, 1, 1], [], []>} : vector<8x128xf32>, vector<128x128xf32>, vector<8x128xf32> -> vector<8x128xf32>
    %c0_15 = arith.constant 0 : index
    %c0_16 = arith.constant 0 : index
    %17 = vector.load %arg7[%c0_15, %c0_16] : memref<1x128xf32, #tpu.memory_space<vmem>>, vector<1x128xf32>
    %18 = vector.broadcast %17 : vector<1x128xf32> to vector<8x128xf32>
    %19 = arith.addf %16, %18 : vector<8x128xf32>
    %cst_17 = arith.constant 0.000000e+00 : f32
    %20 = vector.broadcast %cst_17 : f32 to vector<8x128xf32>
    %21 = arith.maximumf %19, %20 : vector<8x128xf32>
    %c0_18 = arith.constant 0 : index
    %c0_19 = arith.constant 0 : index
    %22 = vector.load %arg8[%c0_18, %c0_19] : memref<128x128xf32, #tpu.memory_space<vmem>>, vector<128x128xf32>
    %cst_20 = arith.constant dense<0.000000e+00> : vector<8x128xf32>
    %23 = tpu.matmul %21, %22, %cst_20 {dimension_numbers = #tpu.dot_dimension_numbers<[1], [0], [0], [1], [0, 0, 1, 1], [], []>} : vector<8x128xf32>, vector<128x128xf32>, vector<8x128xf32> -> vector<8x128xf32>
    %c0_21 = arith.constant 0 : index
    %c0_22 = arith.constant 0 : index
    %24 = vector.load %arg9[%c0_21, %c0_22] : memref<1x128xf32, #tpu.memory_space<vmem>>, vector<1x128xf32>
    %25 = vector.broadcast %24 : vector<1x128xf32> to vector<8x128xf32>
    %26 = arith.addf %23, %25 : vector<8x128xf32>
    %cst_23 = arith.constant 0.000000e+00 : f32
    %27 = vector.broadcast %cst_23 : f32 to vector<8x128xf32>
    %28 = arith.maximumf %26, %27 : vector<8x128xf32>
    %c0_24 = arith.constant 0 : index
    %c0_25 = arith.constant 0 : index
    %29 = vector.load %arg10[%c0_24, %c0_25] : memref<8x128xf32, #tpu.memory_space<vmem>>, vector<8x128xf32>
    tpu.vector_store %arg10[%c0_24, %c0_25], %28 {strides = array<i32>} : memref<8x128xf32, #tpu.memory_space<vmem>>, vector<8x128xf32>,
    return
  }
  func.func @transform_0(%arg0: i32) -> (i32, i32) {
    %c0_i32 = arith.constant 0 : i32
    %c0_i32_0 = arith.constant 0 : i32
    return %arg0, %c0_i32 : i32, i32
  }
  func.func @transform_1(%arg0: i32) -> (i32, i32) {
    %c0_i32 = arith.constant 0 : i32
    %c0_i32_0 = arith.constant 0 : i32
    %c0_i32_1 = arith.constant 0 : i32
    return %c0_i32, %c0_i32_0 : i32, i32
  }
  func.func @transform_2(%arg0: i32) -> (i32, i32) {
    %c0_i32 = arith.constant 0 : i32
    %c0_i32_0 = arith.constant 0 : i32
    %c0_i32_1 = arith.constant 0 : i32
    return %c0_i32, %c0_i32_0 : i32, i32
  }
  func.func @transform_3(%arg0: i32) -> (i32, i32) {
    %c0_i32 = arith.constant 0 : i32
    %c0_i32_0 = arith.constant 0 : i32
    %c0_i32_1 = arith.constant 0 : i32
    return %c0_i32, %c0_i32_0 : i32, i32
  }
  func.func @transform_4(%arg0: i32) -> (i32, i32) {
    %c0_i32 = arith.constant 0 : i32
    %c0_i32_0 = arith.constant 0 : i32
    %c0_i32_1 = arith.constant 0 : i32
    return %c0_i32, %c0_i32_0 : i32, i32
  }
  func.func @transform_5(%arg0: i32) -> (i32, i32) {
    %c0_i32 = arith.constant 0 : i32
    %c0_i32_0 = arith.constant 0 : i32
    %c0_i32_1 = arith.constant 0 : i32
    return %c0_i32, %c0_i32_0 : i32, i32
  }
  func.func @transform_6(%arg0: i32) -> (i32, i32) {
    %c0_i32 = arith.constant 0 : i32
    %c0_i32_0 = arith.constant 0 : i32
    %c0_i32_1 = arith.constant 0 : i32
    return %c0_i32, %c0_i32_0 : i32, i32
  }
  func.func @transform_7(%arg0: i32) -> (i32, i32) {
    %c0_i32 = arith.constant 0 : i32
    %c0_i32_0 = arith.constant 0 : i32
    %c0_i32_1 = arith.constant 0 : i32
    return %c0_i32, %c0_i32_0 : i32, i32
  }
  func.func @transform_8(%arg0: i32) -> (i32, i32) {
    %c0_i32 = arith.constant 0 : i32
    %c0_i32_0 = arith.constant 0 : i32
    %c0_i32_1 = arith.constant 0 : i32
    return %c0_i32, %c0_i32_0 : i32, i32
  }
  func.func @transform_9(%arg0: i32) -> (i32, i32) {
    %c0_i32 = arith.constant 0 : i32
    %c0_i32_0 = arith.constant 0 : i32
    return %arg0, %c0_i32 : i32, i32
  }
}

</mosaic_0001>

<llo_original>
// kernel: autoencoder2_forward.1
$region0: #{autoencoder2_forward.1}
  #allocation0 [shape = 'u32[]', space=smem, size = 0x4, offset = 0x4, fixed_abs, tag = 'smem constant byte address 0x4 - core index']
  #allocation1 [shape = 'u32[72,128]{1,0:T(1,128)}', space=vmem, size = 0x9000, scoped, tag = 'internal scratch']
  %s0 = inlined_call_operand.vmem [shape: f32[8,128], index: 0, kind: input, shape index: {}]
  %s1 = inlined_call_operand.hbm [shape: f32[128,128], index: 1, kind: input, shape index: {}]
  %s2 = inlined_call_operand.vmem [shape: f32[1,128], index: 2, kind: input, shape index: {}]
  %s3 = inlined_call_operand.hbm [shape: f32[128,128], index: 3, kind: input, shape index: {}]
  %s4 = inlined_call_operand.vmem [shape: f32[1,128], index: 4, kind: input, shape index: {}]
  %s5 = inlined_call_operand.hbm [shape: f32[128,128], index: 5, kind: input, shape index: {}]
  %s6 = inlined_call_operand.vmem [shape: f32[1,128], index: 6, kind: input, shape index: {}]
  %s7 = inlined_call_operand.hbm [shape: f32[128,128], index: 7, kind: input, shape index: {}]
  %s8 = inlined_call_operand.vmem [shape: f32[1,128], index: 8, kind: input, shape index: {}]
  %s9 = inlined_call_operand.hbm [shape: f32[8,128], index: 9, kind: output, shape index: {}]
  %s10 = sld [smem:[#allocation0]]
  $region62: #{autoencoder2_forward.1} parent=0
    _
  %s12 = ssub.s32 1, %s10
  %s13 = scalar_select 0, %s12, %s10
  $region1: #{autoencoder2_forward.1} parent=0
    #allocation2 [shape = 'u8[65536]{0}', space=vmem, size = 0x10000, scoped, tag = 'input window, operand 1, single buffered']
    #allocation3 [shape = 's32[1]{0}', space=sflag, size = 0x4, scoped, tag = 'scoped memory for autoencoder2_forward.1']
    #allocation4 [shape = 's32[1]{0}', space=sflag, size = 0x4, scoped, tag = 'scoped memory for autoencoder2_forward.1']
    #allocation5 [shape = 'u8[65536]{0}', space=vmem, size = 0x10000, scoped, tag = 'input window, operand 3, single buffered']
    #allocation6 [shape = 's32[1]{0}', space=sflag, size = 0x4, scoped, tag = 'scoped memory for autoencoder2_forward.1']
    #allocation7 [shape = 'u8[65536]{0}', space=vmem, size = 0x10000, scoped, tag = 'input window, operand 5, single buffered']
    #allocation8 [shape = 'u8[65536]{0}', space=vmem, size = 0x10000, scoped, tag = 'input window, operand 7, single buffered']
    #allocation9 [shape = 's32[1]{0}', space=sflag, size = 0x4, scoped, tag = 'scoped memory for autoencoder2_forward.1']
    #allocation10 [shape = 'u8[4096]{0}', space=vmem, size = 0x1000, scoped, tag = 'output window, operand 0, single buffered']
    %14 = vsyncpa [#allocation3], 0
    %15 = vsyncpa [#allocation6], 0
    %16 = vsyncpa [#allocation9], 0
    %17 = vsyncpa [#allocation4], 0
    // Predicated region
    $region2: #{autoencoder2_forward.1} parent=1 // pred_check
      _
    $region3: #{autoencoder2_forward.1} parent=1 // pred_check_branch
      %19 = sbr.rel (0) target = $region5
    $region4: #{autoencoder2_forward.1} parent=1 // pred_region
      _
    $region5: #{autoencoder2_forward.1} parent=1 // pred_fallthru
      _
    // Predicated region
    $region6: #{autoencoder2_forward.1} parent=1 // pred_check
      _
    $region7: #{autoencoder2_forward.1} parent=1 // pred_check_branch
      %21 = sbr.rel (0) target = $region9
    $region8: #{autoencoder2_forward.1} parent=1 // pred_region
      %23 = vsyncadd [#allocation3], 0
      %s24 = sshll.u32 %s1, 4
      %s25 = int_to_ptr.hbm [resolvable:$true] %s24
      %s26 = sshll.u32 [#allocation2], 4
      %s27 = int_to_ptr.vmem [resolvable:$true] %s26
      %32 = dma.hbm_to_vmem [thread:$0]  %s25, 2048, %s27, [#allocation3], 128, 128, 8
    $region9: #{autoencoder2_forward.1} parent=1 // pred_fallthru
      _
    // Predicated region
    $region10: #{autoencoder2_forward.1} parent=1 // pred_check
      _
    $region11: #{autoencoder2_forward.1} parent=1 // pred_check_branch
      %34 = sbr.rel (0) target = $region13
    $region12: #{autoencoder2_forward.1} parent=1 // pred_region
      _
    $region13: #{autoencoder2_forward.1} parent=1 // pred_fallthru
      _
    // Predicated region
    $region14: #{autoencoder2_forward.1} parent=1 // pred_check
      _
    $region15: #{autoencoder2_forward.1} parent=1 // pred_check_branch
      %36 = sbr.rel (0) target = $region17
    $region16: #{autoencoder2_forward.1} parent=1 // pred_region
      %38 = vsyncadd [#allocation6], 0
      %s39 = sshll.u32 %s3, 4
      %s40 = int_to_ptr.hbm [resolvable:$true] %s39
      %s41 = sshll.u32 [#allocation5], 4
      %s42 = int_to_ptr.vmem [resolvable:$true] %s41
      %47 = dma.hbm_to_vmem [thread:$0]  %s40, 2048, %s42, [#allocation6], 128, 128, 8
    $region17: #{autoencoder2_forward.1} parent=1 // pred_fallthru
      _
    // Predicated region
    $region18: #{autoencoder2_forward.1} parent=1 // pred_check
      _
    $region19: #{autoencoder2_forward.1} parent=1 // pred_check_branch
      %49 = sbr.rel (0) target = $region21
    $region20: #{autoencoder2_forward.1} parent=1 // pred_region
      _
    $region21: #{autoencoder2_forward.1} parent=1 // pred_fallthru
      _
    // Predicated region
    $region22: #{autoencoder2_forward.1} parent=1 // pred_check
      _
    $region23: #{autoencoder2_forward.1} parent=1 // pred_check_branch
      %51 = sbr.rel (0) target = $region25
    $region24: #{autoencoder2_forward.1} parent=1 // pred_region
      %53 = vsyncadd [#allocation6], 0
      %s54 = sshll.u32 %s5, 4
      %s55 = int_to_ptr.hbm [resolvable:$true] %s54
      %s56 = sshll.u32 [#allocation7], 4
      %s57 = int_to_ptr.vmem [resolvable:$true] %s56
      %62 = dma.hbm_to_vmem [thread:$0]  %s55, 2048, %s57, [#allocation6], 128, 128, 8
    $region25: #{autoencoder2_forward.1} parent=1 // pred_fallthru
      _
    // Predicated region
    $region26: #{autoencoder2_forward.1} parent=1 // pred_check
      _
    $region27: #{autoencoder2_forward.1} parent=1 // pred_check_branch
      %64 = sbr.rel (0) target = $region29
    $region28: #{autoencoder2_forward.1} parent=1 // pred_region
      _
    $region29: #{autoencoder2_forward.1} parent=1 // pred_fallthru
      _
    // Predicated region
    $region30: #{autoencoder2_forward.1} parent=1 // pred_check
      _
    $region31: #{autoencoder2_forward.1} parent=1 // pred_check_branch
      %66 = sbr.rel (0) target = $region33
    $region32: #{autoencoder2_forward.1} parent=1 // pred_region
      %68 = vsyncadd [#allocation9], 0
      %s69 = sshll.u32 %s7, 4
      %s70 = int_to_ptr.hbm [resolvable:$true] %s69
      %s71 = sshll.u32 [#allocation8], 4
      %s72 = int_to_ptr.vmem [resolvable:$true] %s71
      %77 = dma.hbm_to_vmem [thread:$0]  %s70, 2048, %s72, [#allocation9], 128, 128, 8
    $region33: #{autoencoder2_forward.1} parent=1 // pred_fallthru
      _
    // Predicated region
    $region34: #{autoencoder2_forward.1} parent=1 // pred_check
      _
    $region35: #{autoencoder2_forward.1} parent=1 // pred_check_branch
      %79 = sbr.rel (0) target = $region37
    $region36: #{autoencoder2_forward.1} parent=1 // pred_region
      _
    $region37: #{autoencoder2_forward.1} parent=1 // pred_fallthru
      _
    // Predicated region
    $region38: #{autoencoder2_forward.1} parent=1 // pred_check
      _
    $region39: #{autoencoder2_forward.1} parent=1 // pred_check_branch
      %81 = sbr.rel (0) target = $region41
    $region40: #{autoencoder2_forward.1} parent=1 // pred_region
      %83 = dma.done [#allocation3], 2048
    $region41: #{autoencoder2_forward.1} parent=1 // pred_fallthru
      _
    // Predicated region
    $region42: #{autoencoder2_forward.1} parent=1 // pred_check
      _
    $region43: #{autoencoder2_forward.1} parent=1 // pred_check_branch
      %85 = sbr.rel (0) target = $region45
    $region44: #{autoencoder2_forward.1} parent=1 // pred_region
      %87 = dma.done [#allocation6], 2048
    $region45: #{autoencoder2_forward.1} parent=1 // pred_fallthru
      _
    // Predicated region
    $region46: #{autoencoder2_forward.1} parent=1 // pred_check
      _
    $region47: #{autoencoder2_forward.1} parent=1 // pred_check_branch
      %89 = sbr.rel (0) target = $region49
    $region48: #{autoencoder2_forward.1} parent=1 // pred_region
      %91 = dma.done [#allocation6], 2048
    $region49: #{autoencoder2_forward.1} parent=1 // pred_fallthru
      _
    // Predicated region
    $region50: #{autoencoder2_forward.1} parent=1 // pred_check
      _
    $region51: #{autoencoder2_forward.1} parent=1 // pred_check_branch
      %93 = sbr.rel (0) target = $region53
    $region52: #{autoencoder2_forward.1} parent=1 // pred_region
      %95 = dma.done [#allocation9], 2048
    $region53: #{autoencoder2_forward.1} parent=1 // pred_fallthru
      _
    %v96 = vld [vmem:[%s0] sm:$0xff]
    %v97 = vld [vmem:[#allocation2] sm:$0xff]
    %v98 = vld [vmem:[#allocation2 + $0x8] sm:$0xff]
    %v99 = vld [vmem:[#allocation2 + $0x10] sm:$0xff]
    %v100 = vld [vmem:[#allocation2 + $0x18] sm:$0xff]
    %v101 = vld [vmem:[#allocation2 + $0x20] sm:$0xff]
    %v102 = vld [vmem:[#allocation2 + $0x28] sm:$0xff]
    %v103 = vld [vmem:[#allocation2 + $0x30] sm:$0xff]
    %v104 = vld [vmem:[#allocation2 + $0x38] sm:$0xff]
    %v105 = vld [vmem:[#allocation2 + $0x40] sm:$0xff]
    %v106 = vld [vmem:[#allocation2 + $0x48] sm:$0xff]
    %v107 = vld [vmem:[#allocation2 + $0x50] sm:$0xff]
    %v108 = vld [vmem:[#allocation2 + $0x58] sm:$0xff]
    %v109 = vld [vmem:[#allocation2 + $0x60] sm:$0xff]
    %v110 = vld [vmem:[#allocation2 + $0x68] sm:$0xff]
    %v111 = vld [vmem:[#allocation2 + $0x70] sm:$0xff]
    %v112 = vld [vmem:[#allocation2 + $0x78] sm:$0xff]
    %v113 = vld [vmem:[%s2] sm:$0x1]
    %v115 = vperm.slane %v113, 0
    %117 = vmatpush.msra.mxu0 %v112
    %118 = vmatpush.msra.mxu0 %v111
    %119 = vmatpush.msra.mxu0 %v110
    %120 = vmatpush.msra.mxu0 %v109
    %121 = vmatpush.msra.mxu0 %v108
    %122 = vmatpush.msra.mxu0 %v107
    %123 = vmatpush.msra.mxu0 %v106
    %124 = vmatpush.msra.mxu0 %v105
    %125 = vmatpush.msra.mxu0 %v104
    %126 = vmatpush.msra.mxu0 %v103
    %127 = vmatpush.msra.mxu0 %v102
    %128 = vmatpush.msra.mxu0 %v101
    %129 = vmatpush.msra.mxu0 %v100
    %130 = vmatpush.msra.mxu0 %v99
    %131 = vmatpush.msra.mxu0 %v98
    %132 = vmatpush.msra.mxu0 %v97
    %133 = vmatmul.f32.gmra.mxu0 %v96
    %v134 = vpop.f32.mrf.mxu0
    %v135 = vadd.f32 %v115, %v134
    %136 = vdwg.mxu0
    %v137 = vmax.f32 %v135, 0.0
    %v138 = vld [vmem:[#allocation5] sm:$0xff]
    %v139 = vld [vmem:[#allocation5 + $0x8] sm:$0xff]
    %v140 = vld [vmem:[#allocation5 + $0x10] sm:$0xff]
    %v141 = vld [vmem:[#allocation5 + $0x18] sm:$0xff]
    %v142 = vld [vmem:[#allocation5 + $0x20] sm:$0xff]
    %v143 = vld [vmem:[#allocation5 + $0x28] sm:$0xff]
    %v144 = vld [vmem:[#allocation5 + $0x30] sm:$0xff]
    %v145 = vld [vmem:[#allocation5 + $0x38] sm:$0xff]
    %v146 = vld [vmem:[#allocation5 + $0x40] sm:$0xff]
    %v147 = vld [vmem:[#allocation5 + $0x48] sm:$0xff]
    %v148 = vld [vmem:[#allocation5 + $0x50] sm:$0xff]
    %v149 = vld [vmem:[#allocation5 + $0x58] sm:$0xff]
    %v150 = vld [vmem:[#allocation5 + $0x60] sm:$0xff]
    %v151 = vld [vmem:[#allocation5 + $0x68] sm:$0xff]
    %v152 = vld [vmem:[#allocation5 + $0x70] sm:$0xff]
    %v153 = vld [vmem:[#allocation5 + $0x78] sm:$0xff]
    %v154 = vld [vmem:[%s4] sm:$0x1]
    %v156 = vperm.slane %v154, 0
    %158 = vmatpush.msra.mxu0 %v153
    %159 = vmatpush.msra.mxu0 %v152
    %160 = vmatpush.msra.mxu0 %v151
    %161 = vmatpush.msra.mxu0 %v150
    %162 = vmatpush.msra.mxu0 %v149
    %163 = vmatpush.msra.mxu0 %v148
    %164 = vmatpush.msra.mxu0 %v147
    %165 = vmatpush.msra.mxu0 %v146
    %166 = vmatpush.msra.mxu0 %v145
    %167 = vmatpush.msra.mxu0 %v144
    %168 = vmatpush.msra.mxu0 %v143
    %169 = vmatpush.msra.mxu0 %v142
    %170 = vmatpush.msra.mxu0 %v141
    %171 = vmatpush.msra.mxu0 %v140
    %172 = vmatpush.msra.mxu0 %v139
    %173 = vmatpush.msra.mxu0 %v138
    %174 = vmatmul.f32.gmra.mxu0 %v137
    %v175 = vpop.f32.mrf.mxu0
    %v176 = vadd.f32 %v156, %v175
    %177 = vdwg.mxu0
    %v178 = vmax.f32 %v176, 0.0
    %v179 = vld [vmem:[#allocation7] sm:$0xff]
    %v180 = vld [vmem:[#allocation7 + $0x8] sm:$0xff]
    %v181 = vld [vmem:[#allocation7 + $0x10] sm:$0xff]
    %v182 = vld [vmem:[#allocation7 + $0x18] sm:$0xff]
    %v183 = vld [vmem:[#allocation7 + $0x20] sm:$0xff]
    %v184 = vld [vmem:[#allocation7 + $0x28] sm:$0xff]
    %v185 = vld [vmem:[#allocation7 + $0x30] sm:$0xff]
    %v186 = vld [vmem:[#allocation7 + $0x38] sm:$0xff]
    %v187 = vld [vmem:[#allocation7 + $0x40] sm:$0xff]
    %v188 = vld [vmem:[#allocation7 + $0x48] sm:$0xff]
    %v189 = vld [vmem:[#allocation7 + $0x50] sm:$0xff]
    %v190 = vld [vmem:[#allocation7 + $0x58] sm:$0xff]
    %v191 = vld [vmem:[#allocation7 + $0x60] sm:$0xff]
    %v192 = vld [vmem:[#allocation7 + $0x68] sm:$0xff]
    %v193 = vld [vmem:[#allocation7 + $0x70] sm:$0xff]
    %v194 = vld [vmem:[#allocation7 + $0x78] sm:$0xff]
    %v195 = vld [vmem:[%s6] sm:$0x1]
    %v197 = vperm.slane %v195, 0
    %199 = vmatpush.msra.mxu0 %v194
    %200 = vmatpush.msra.mxu0 %v193
    %201 = vmatpush.msra.mxu0 %v192
    %202 = vmatpush.msra.mxu0 %v191
    %203 = vmatpush.msra.mxu0 %v190
    %204 = vmatpush.msra.mxu0 %v189
    %205 = vmatpush.msra.mxu0 %v188
    %206 = vmatpush.msra.mxu0 %v187
    %207 = vmatpush.msra.mxu0 %v186
    %208 = vmatpush.msra.mxu0 %v185
    %209 = vmatpush.msra.mxu0 %v184
    %210 = vmatpush.msra.mxu0 %v183
    %211 = vmatpush.msra.mxu0 %v182
    %212 = vmatpush.msra.mxu0 %v181
    %213 = vmatpush.msra.mxu0 %v180
    %214 = vmatpush.msra.mxu0 %v179
    %215 = vmatmul.f32.gmra.mxu0 %v178
    %v216 = vpop.f32.mrf.mxu0
    %v217 = vadd.f32 %v197, %v216
    %218 = vdwg.mxu0
    %v219 = vmax.f32 %v217, 0.0
    %v220 = vld [vmem:[#allocation8] sm:$0xff]
    %v221 = vld [vmem:[#allocation8 + $0x8] sm:$0xff]
    %v222 = vld [vmem:[#allocation8 + $0x10] sm:$0xff]
    %v223 = vld [vmem:[#allocation8 + $0x18] sm:$0xff]
    %v224 = vld [vmem:[#allocation8 + $0x20] sm:$0xff]
    %v225 = vld [vmem:[#allocation8 + $0x28] sm:$0xff]
    %v226 = vld [vmem:[#allocation8 + $0x30] sm:$0xff]
    %v227 = vld [vmem:[#allocation8 + $0x38] sm:$0xff]
    %v228 = vld [vmem:[#allocation8 + $0x40] sm:$0xff]
    %v229 = vld [vmem:[#allocation8 + $0x48] sm:$0xff]
    %v230 = vld [vmem:[#allocation8 + $0x50] sm:$0xff]
    %v231 = vld [vmem:[#allocation8 + $0x58] sm:$0xff]
    %v232 = vld [vmem:[#allocation8 + $0x60] sm:$0xff]
    %v233 = vld [vmem:[#allocation8 + $0x68] sm:$0xff]
    %v234 = vld [vmem:[#allocation8 + $0x70] sm:$0xff]
    %v235 = vld [vmem:[#allocation8 + $0x78] sm:$0xff]
    %v236 = vld [vmem:[%s8] sm:$0x1]
    %v238 = vperm.slane %v236, 0
    %240 = vmatpush.msra.mxu0 %v235
    %241 = vmatpush.msra.mxu0 %v234
    %242 = vmatpush.msra.mxu0 %v233
    %243 = vmatpush.msra.mxu0 %v232
    %244 = vmatpush.msra.mxu0 %v231
    %245 = vmatpush.msra.mxu0 %v230
    %246 = vmatpush.msra.mxu0 %v229
    %247 = vmatpush.msra.mxu0 %v228
    %248 = vmatpush.msra.mxu0 %v227
    %249 = vmatpush.msra.mxu0 %v226
    %250 = vmatpush.msra.mxu0 %v225
    %251 = vmatpush.msra.mxu0 %v224
    %252 = vmatpush.msra.mxu0 %v223
    %253 = vmatpush.msra.mxu0 %v222
    %254 = vmatpush.msra.mxu0 %v221
    %255 = vmatpush.msra.mxu0 %v220
    %256 = vmatmul.f32.gmra.mxu0 %v219
    %v257 = vpop.f32.mrf.mxu0
    %v258 = vadd.f32 %v238, %v257
    %259 = vdwg.mxu0
    %v260 = vmax.f32 %v258, 0.0
    %261 = vst [vmem:[#allocation10] sm:$0xff] %v260
    // Predicated region
    $region54: #{autoencoder2_forward.1} parent=1 // pred_check
      _
    $region55: #{autoencoder2_forward.1} parent=1 // pred_check_branch
      %263 = sbr.rel (0) target = $region57
    $region56: #{autoencoder2_forward.1} parent=1 // pred_region
      %265 = vsyncadd [#allocation4], 0
      %s267 = sshll.u32 [#allocation10], 4
      %s268 = int_to_ptr.vmem [resolvable:$true] %s267
      %s269 = sshll.u32 %s9, 4
      %s270 = int_to_ptr.hbm [resolvable:$true] %s269
      %272 = dma.vmem_to_hbm [thread:$0]  %s268, 128, %s270, [#allocation4]
    $region57: #{autoencoder2_forward.1} parent=1 // pred_fallthru
      _
    // Predicated region
    $region58: #{autoencoder2_forward.1} parent=1 // pred_check
      _
    $region59: #{autoencoder2_forward.1} parent=1 // pred_check_branch
      %274 = sbr.rel (0) target = $region61
    $region60: #{autoencoder2_forward.1} parent=1 // pred_region
      %276 = dma.done [#allocation4], 128
    $region61: #{autoencoder2_forward.1} parent=1 // pred_fallthru
      _
    %277 = vsyncpa [#allocation3], 1
    %278 = vsyncpa [#allocation6], 1
    %279 = vsyncpa [#allocation9], 1
    %280 = vsyncpa [#allocation4], 1

</llo_original>
